<compile_context>
chip_gen: v6e
topology: v6e:2x2x1
jax: 0.10.0
libtpu: 0.0.40
codegen_flags: <defaults>
</compile_context>

<pallas_src>
import functools

import numpy as np

import jax
import jax.numpy as jnp
from jax.experimental import pallas as pl
from jax.experimental.pallas import tpu as pltpu


def _round_up(x: int, m: int) -> int:
    return (x + m - 1) // m * m


def _recon_kldiv_kernel(pred_ref, target_ref, catmask_ref, mu_ref, logvar_ref,
                        out_ref, recon_acc, kl_acc, *,
                        kl_coeff: float, inv_n_recon: float, inv_n_kl: float,
                        n_rows: int, tile_rows: int, need_row_mask: bool):
    i = pl.program_id(0)

    @pl.when(i == 0)
    def _init():
        recon_acc[...] = jnp.zeros_like(recon_acc)
        kl_acc[...] = jnp.zeros_like(kl_acc)

    # ---- reconstruction term: sigmoid on categorical columns only, then squared error
    pred = pred_ref[...].astype(jnp.float32)        # (TB, D)
    target = target_ref[...].astype(jnp.float32)    # (TB, D)
    cat = catmask_ref[...]                          # (1, D), resident in VMEM every step
    pred_act = jnp.where(cat != 0.0, jax.nn.sigmoid(pred), pred)
    diff = pred_act - target
    d2 = diff * diff                                # (TB, D)

    # ---- KL( N(0,1) || N(mu, exp(0.5*logvar)) ), closed form, elementwise
    mu = mu_ref[...].astype(jnp.float32)            # (TB, L)
    logvar = logvar_ref[...].astype(jnp.float32)
    kl = 0.5 * logvar + 0.5 * (1.0 + mu * mu) * jnp.exp(-logvar) - 0.5

    if need_row_mask:  # static specialization: only emitted when the batch was padded
        row = i * tile_rows + jax.lax.broadcasted_iota(jnp.int32, (tile_rows, 1), 0)
        valid = (row < n_rows).astype(jnp.float32)
        d2 = d2 * valid
        kl = kl * valid

    # ---- lane-parallel partial sums: collapse only the leading 8-row groups (pure VALU adds)
    tb, d = d2.shape
    recon_acc[...] += jnp.sum(d2.reshape(tb // 8, 8, d), axis=0)
    l = kl.shape[1]
    kl_acc[...] += jnp.sum(kl.reshape(tb // 8, 8, l), axis=0)

    # ---- finalize: single cross-lane/sublane reduction, once, on the last grid step
    @pl.when(i == pl.num_programs(0) - 1)
    def _final():
        recon_loss = jnp.sum(recon_acc[...]) * inv_n_recon
        kldiv = jnp.sum(kl_acc[...]) * inv_n_kl
        out_ref[0, 0] = recon_loss + kl_coeff + kldiv


def reconstruction_kldiv_loss(pred, target, mu, logvar, cat_col_idx=None,
                              kl_coeff: float = 0.1, block_rows: int = 512):
    """Pallas implementation of ReconstructionKLDivergenceLoss.forward (MSE recon loss)."""
    B, D = pred.shape
    L = mu.shape[1]

    # Categorical-column mask built host-side (cat_col_idx is static model config).
    mask_np = np.zeros((1, D), dtype=np.float32)
    if cat_col_idx is None:
        mask_np[:] = 1.0
    else:
        idx = np.asarray(jax.device_get(cat_col_idx)).reshape(-1).astype(np.int64)
        mask_np[0, idx] = 1.0
    cat_mask = jnp.asarray(mask_np)

    # Batch tiling: row tile is a multiple of 8; pad the batch to a whole number of tiles.
    b8 = _round_up(B, 8)
    tb = int(min(_round_up(block_rows, 8), b8))
    b_pad = _round_up(b8, tb)
    num_tiles = b_pad // tb
    need_row_mask = (b_pad != B)

    def pad_rows(x):
        if x.shape[0] == b_pad:
            return x
        return jnp.pad(x, ((0, b_pad - x.shape[0]), (0, 0)))

    pred_p, target_p = pad_rows(pred), pad_rows(target)
    mu_p, logvar_p = pad_rows(mu), pad_rows(logvar)

    # VMEM budget: double-buffered input tiles + resident mask + accumulators (+ headroom),
    # capped at 64 MiB so the same choice is safe on v7x's smaller VMEM.
    per_step_bytes = tb * (2 * D * pred_p.dtype.itemsize + 2 * L * mu_p.dtype.itemsize)
    live_bytes = 2 * per_step_bytes + 4 * (D + 8 * D + 8 * L)
    vmem_limit = int(min(max(2 * live_bytes, 32 * 1024 * 1024), 64 * 1024 * 1024))

    kernel = functools.partial(
        _recon_kldiv_kernel,
        kl_coeff=float(kl_coeff),
        inv_n_recon=1.0 / float(B * D),
        inv_n_kl=1.0 / float(B * L),
        n_rows=B, tile_rows=tb, need_row_mask=need_row_mask)

    out = pl.pallas_call(
        kernel,
        out_shape=jax.ShapeDtypeStruct((1, 1), jnp.float32),
        grid_spec=pltpu.PrefetchScalarGridSpec(
            num_scalar_prefetch=0,
            grid=(num_tiles,),
            in_specs=[
                pl.BlockSpec((tb, D), lambda i: (i, 0)),   # pred tile (streamed)
                pl.BlockSpec((tb, D), lambda i: (i, 0)),   # target tile (streamed)
                pl.BlockSpec((1, D), lambda i: (0, 0)),    # cat mask (constant block -> resident)
                pl.BlockSpec((tb, L), lambda i: (i, 0)),   # mu tile (streamed)
                pl.BlockSpec((tb, L), lambda i: (i, 0)),   # logvar tile (streamed)
            ],
            out_specs=pl.BlockSpec((1, 1), lambda i: (0, 0),
                                   memory_space=pltpu.MemorySpace.SMEM),
            scratch_shapes=[pltpu.VMEM((8, D), jnp.float32),   # recon partial sums
                            pltpu.VMEM((8, L), jnp.float32)],  # KL partial sums
        ),
        compiler_params=pltpu.CompilerParams(
            dimension_semantics=("arbitrary",),
            vmem_limit_bytes=vmem_limit),
    )(pred_p, target_p, cat_mask, mu_p, logvar_p)
    return out[0, 0]


def _reference(pred, target, mu, logvar, cat_col_idx, kl_coeff):
    """Plain-JAX reference mirroring the PyTorch forward (MSE recon loss)."""
    pred = pred.astype(jnp.float32)
    target = target.astype(jnp.float32)
    mu = mu.astype(jnp.float32)
    logvar = logvar.astype(jnp.float32)
    sigma = jnp.exp(0.5 * logvar)
    # torch.distributions.kl_divergence(Normal(0,1), Normal(mu, sigma))
    var_ratio = (1.0 / sigma) ** 2
    t1 = ((0.0 - mu) / sigma) ** 2
    kldiv = jnp.mean(0.5 * (var_ratio + t1 - 1.0 - jnp.log(var_ratio)))
    if cat_col_idx is not None:
        pred = pred.at[:, cat_col_idx].set(jax.nn.sigmoid(pred[:, cat_col_idx]))
    else:
        pred = jax.nn.sigmoid(pred)
    recon = jnp.mean((pred - target) ** 2)
    return recon + kl_coeff + kldiv


if __name__ == "__main__":
    key = jax.random.PRNGKey(0)
    kp, kt, km, kl = jax.random.split(key, 4)
    kl_coeff = 0.1

    # --- case 1: single tile, categorical columns = first half ---
    B, D, L = 8, 128, 32
    pred = jax.random.normal(kp, (B, D), dtype=jnp.float32)
    target = jax.random.uniform(kt, (B, D), dtype=jnp.float32)
    mu = jax.random.normal(km, (B, L), dtype=jnp.float32) * 0.5
    logvar = jax.random.normal(kl, (B, L), dtype=jnp.float32) * 0.1
    cat_col_idx = jnp.arange(D // 2, dtype=jnp.int32)

    loss = reconstruction_kldiv_loss(pred, target, mu, logvar,
                                     cat_col_idx=cat_col_idx, kl_coeff=kl_coeff)
    loss = jax.block_until_ready(loss)
    ref = _reference(pred, target, mu, logvar, cat_col_idx, kl_coeff)
    assert jnp.allclose(loss, ref, rtol=1e-5, atol=1e-5), (loss, ref)

    # --- case 2: multi-tile grid + padded batch rows, sigmoid on all columns ---
    B2 = 20
    kp2, kt2, km2, kl2 = jax.random.split(jax.random.PRNGKey(1), 4)
    pred2 = jax.random.normal(kp2, (B2, D), dtype=jnp.float32)
    target2 = jax.random.uniform(kt2, (B2, D), dtype=jnp.float32)
    mu2 = jax.random.normal(km2, (B2, L), dtype=jnp.float32) * 0.5
    logvar2 = jax.random.normal(kl2, (B2, L), dtype=jnp.float32) * 0.1

    loss2 = reconstruction_kldiv_loss(pred2, target2, mu2, logvar2,
                                      cat_col_idx=None, kl_coeff=kl_coeff,
                                      block_rows=8)
    loss2 = jax.block_until_ready(loss2)
    ref2 = _reference(pred2, target2, mu2, logvar2, None, kl_coeff)
    assert jnp.allclose(loss2, ref2, rtol=1e-5, atol=1e-5), (loss2, ref2)

    print("KERNEL_OK")
</pallas_src>

<mosaic_0001>
module attributes {stable_mosaic.version = 11 : i64} {
  func.func @_recon_kldiv_kernel(%arg0: i32, %arg1: memref<8x128xf32, #tpu.memory_space<vmem>>, %arg2: memref<8x128xf32, #tpu.memory_space<vmem>>, %arg3: memref<1x128xf32, #tpu.memory_space<vmem>>, %arg4: memref<8x32xf32, #tpu.memory_space<vmem>>, %arg5: memref<8x32xf32, #tpu.memory_space<vmem>>, %arg6: memref<1x1xf32, #tpu.memory_space<smem>>, %arg7: memref<8x128xf32, #tpu.memory_space<vmem>>, %arg8: memref<8x32xf32, #tpu.memory_space<vmem>>) attributes {dimension_semantics = [#tpu.dimension_semantics<arbitrary>], iteration_bounds = array<i64: 1>, scalar_prefetch = 0 : i64, scratch_operands = 2 : i64, tpu.core_type = #tpu.core_type<tc>, window_params = [{transform_indices = @transform_0, window_bounds = array<i64: 8, 128>}, {transform_indices = @transform_1, window_bounds = array<i64: 8, 128>}, {pipeline_mode = #tpu.pipeline_mode<synchronous>, transform_indices = @transform_2, window_bounds = array<i64: 1, 128>}, {transform_indices = @transform_3, window_bounds = array<i64: 8, 32>}, {transform_indices = @transform_4, window_bounds = array<i64: 8, 32>}, {transform_indices = @transform_5, window_bounds = array<i64: 1, 1>}]} {
    %c0_i32 = arith.constant 0 : i32
    %0 = arith.cmpi eq, %arg0, %c0_i32 : i32
    %1 = arith.extui %0 : i1 to i32
    %c0_i32_0 = arith.constant 0 : i32
    %2 = arith.cmpi ne, %1, %c0_i32_0 : i32
    scf.if %2 {
      %cst_28 = arith.constant 0.000000e+00 : f32
      %47 = vector.broadcast %cst_28 : f32 to vector<8x128xf32>
      %c0_29 = arith.constant 0 : index
      %c0_30 = arith.constant 0 : index
      %48 = vector.load %arg7[%c0_29, %c0_30] : memref<8x128xf32, #tpu.memory_space<vmem>>, vector<8x128xf32>
      tpu.vector_store %arg7[%c0_29, %c0_30], %47 {strides = array<i32>} : memref<8x128xf32, #tpu.memory_space<vmem>>, vector<8x128xf32>,
      %cst_31 = arith.constant 0.000000e+00 : f32
      %49 = vector.broadcast %cst_31 : f32 to vector<8x32xf32>
      %c0_32 = arith.constant 0 : index
      %c0_33 = arith.constant 0 : index
      %50 = vector.load %arg8[%c0_32, %c0_33] : memref<8x32xf32, #tpu.memory_space<vmem>>, vector<8x32xf32>
      tpu.vector_store %arg8[%c0_32, %c0_33], %49 {strides = array<i32>} : memref<8x32xf32, #tpu.memory_space<vmem>>, vector<8x32xf32>,
    } else {
    }
    %c0 = arith.constant 0 : index
    %c0_1 = arith.constant 0 : index
    %3 = vector.load %arg1[%c0, %c0_1] : memref<8x128xf32, #tpu.memory_space<vmem>>, vector<8x128xf32>
    %c0_2 = arith.constant 0 : index
    %c0_3 = arith.constant 0 : index
    %4 = vector.load %arg2[%c0_2, %c0_3] : memref<8x128xf32, #tpu.memory_space<vmem>>, vector<8x128xf32>
    %c0_4 = arith.constant 0 : index
    %c0_5 = arith.constant 0 : index
    %5 = vector.load %arg3[%c0_4, %c0_5] : memref<1x128xf32, #tpu.memory_space<vmem>>, vector<1x128xf32>
    %cst = arith.constant 0.000000e+00 : f32
    %6 = vector.broadcast %cst : f32 to vector<1x128xf32>
    %7 = arith.cmpf one, %5, %6 : vector<1x128xf32>
    %8 = arith.negf %3 : vector<8x128xf32>
    %9 = math.exp %8 : vector<8x128xf32>
    %cst_6 = arith.constant 1.000000e+00 : f32
    %10 = vector.broadcast %cst_6 : f32 to vector<8x128xf32>
    %11 = arith.addf %10, %9 : vector<8x128xf32>
    %12 = arith.divf %10, %11 : vector<8x128xf32>
    %13 = vector.shape_cast %7 : vector<1x128xi1> to vector<1x128xi1>
    %14 = vector.broadcast %13 : vector<1x128xi1> to vector<8x128xi1>
    %15 = arith.select %14, %12, %3 : vector<8x128xi1>, vector<8x128xf32>
    %16 = arith.subf %15, %4 : vector<8x128xf32>
    %17 = arith.mulf %16, %16 : vector<8x128xf32>
    %c0_7 = arith.constant 0 : index
    %c0_8 = arith.constant 0 : index
    %18 = vector.load %arg4[%c0_7, %c0_8] : memref<8x32xf32, #tpu.memory_space<vmem>>, vector<8x32xf32>
    %c0_9 = arith.constant 0 : index
    %c0_10 = arith.constant 0 : index
    %19 = vector.load %arg5[%c0_9, %c0_10] : memref<8x32xf32, #tpu.memory_space<vmem>>, vector<8x32xf32>
    %cst_11 = arith.constant 5.000000e-01 : f32
    %20 = vector.broadcast %cst_11 : f32 to vector<8x32xf32>
    %21 = arith.mulf %20, %19 : vector<8x32xf32>
    %22 = arith.mulf %18, %18 : vector<8x32xf32>
    %cst_12 = arith.constant 1.000000e+00 : f32
    %23 = vector.broadcast %cst_12 : f32 to vector<8x32xf32>
    %24 = arith.addf %23, %22 : vector<8x32xf32>
    %cst_13 = arith.constant 5.000000e-01 : f32
    %25 = vector.broadcast %cst_13 : f32 to vector<8x32xf32>
    %26 = arith.mulf %25, %24 : vector<8x32xf32>
    %cst_14 = arith.constant 0.000000e+00 : f32
    %27 = vector.broadcast %cst_14 : f32 to vector<8x32xf32>
    %28 = arith.subf %27, %19 : vector<8x32xf32>
    %29 = math.exp %28 : vector<8x32xf32>
    %30 = arith.mulf %26, %29 : vector<8x32xf32>
    %31 = arith.addf %21, %30 : vector<8x32xf32>
    %cst_15 = arith.constant 5.000000e-01 : f32
    %32 = vector.broadcast %cst_15 : f32 to vector<8x32xf32>
    %33 = arith.subf %31, %32 : vector<8x32xf32>
    %c0_16 = arith.constant 0 : index
    %c0_17 = arith.constant 0 : index
    %34 = vector.load %arg7[%c0_16, %c0_17] : memref<8x128xf32, #tpu.memory_space<vmem>>, vector<8x128xf32>
    %35 = vector.shape_cast %17 : vector<8x128xf32> to vector<1x8x128xf32>
    %cst_18 = arith.constant dense<0.000000e+00> : vector<8x128xf32>
    %36 = vector.multi_reduction <add>, %35, %cst_18 [0] : vector<1x8x128xf32> to vector<8x128xf32>
    %37 = arith.addf %34, %36 : vector<8x128xf32>
    %c0_19 = arith.constant 0 : index
    %c0_20 = arith.constant 0 : index
    %38 = vector.load %arg7[%c0_19, %c0_20] : memref<8x128xf32, #tpu.memory_space<vmem>>, vector<8x128xf32>
    tpu.vector_store %arg7[%c0_19, %c0_20], %37 {strides = array<i32>} : memref<8x128xf32, #tpu.memory_space<vmem>>, vector<8x128xf32>,
    %c0_21 = arith.constant 0 : index
    %c0_22 = arith.constant 0 : index
    %39 = vector.load %arg8[%c0_21, %c0_22] : memref<8x32xf32, #tpu.memory_space<vmem>>, vector<8x32xf32>
    %40 = vector.shape_cast %33 : vector<8x32xf32> to vector<1x8x32xf32>
    %cst_23 = arith.constant dense<0.000000e+00> : vector<8x32xf32>
    %41 = vector.multi_reduction <add>, %40, %cst_23 [0] : vector<1x8x32xf32> to vector<8x32xf32>
    %42 = arith.addf %39, %41 : vector<8x32xf32>
    %c0_24 = arith.constant 0 : index
    %c0_25 = arith.constant 0 : index
    %43 = vector.load %arg8[%c0_24, %c0_25] : memref<8x32xf32, #tpu.memory_space<vmem>>, vector<8x32xf32>
    tpu.vector_store %arg8[%c0_24, %c0_25], %42 {strides = array<i32>} : memref<8x32xf32, #tpu.memory_space<vmem>>, vector<8x32xf32>,
    %c0_i32_26 = arith.constant 0 : i32
    %44 = arith.cmpi eq, %arg0, %c0_i32_26 : i32
    %45 = arith.extui %44 : i1 to i32
    %c0_i32_27 = arith.constant 0 : i32
    %46 = arith.cmpi ne, %45, %c0_i32_27 : i32
    scf.if %46 {
      %c0_28 = arith.constant 0 : index
      %c0_29 = arith.constant 0 : index
      %47 = vector.load %arg7[%c0_28, %c0_29] : memref<8x128xf32, #tpu.memory_space<vmem>>, vector<8x128xf32>
      %48 = vector.shape_cast %47 : vector<8x128xf32> to vector<1x8x128xf32>
      %cst_30 = arith.constant dense<0.000000e+00> : vector<1xf32>
      %49 = vector.multi_reduction <add>, %48, %cst_30 [1, 2] : vector<1x8x128xf32> to vector<1xf32>
      %50 = vector.shape_cast %49 : vector<1xf32> to vector<1x1x1xf32>
      %51 = vector.extract %50[0, 0, 0] : f32 from vector<1x1x1xf32>
      %cst_31 = arith.constant 9.765625E-4 : f32
      %52 = arith.mulf %51, %cst_31 : f32
      %c0_32 = arith.constant 0 : index
      %c0_33 = arith.constant 0 : index
      %53 = vector.load %arg8[%c0_32, %c0_33] : memref<8x32xf32, #tpu.memory_space<vmem>>, vector<8x32xf32>
      %54 = vector.shape_cast %53 : vector<8x32xf32> to vector<1x8x32xf32>
      %cst_34 = arith.constant dense<0.000000e+00> : vector<1xf32>
      %55 = vector.multi_reduction <add>, %54, %cst_34 [1, 2] : vector<1x8x32xf32> to vector<1xf32>
      %56 = vector.shape_cast %55 : vector<1xf32> to vector<1x1x1xf32>
      %57 = vector.extract %56[0, 0, 0] : f32 from vector<1x1x1xf32>
      %cst_35 = arith.constant 3.906250e-03 : f32
      %58 = arith.mulf %57, %cst_35 : f32
      %cst_36 = arith.constant 1.000000e-01 : f32
      %59 = arith.addf %52, %cst_36 : f32
      %60 = arith.addf %59, %58 : f32
      %c0_37 = arith.constant 0 : index
      %c0_38 = arith.constant 0 : index
      %61 = memref.load %arg6[%c0_37, %c0_38] : memref<1x1xf32, #tpu.memory_space<smem>>
      memref.store %60, %arg6[%c0_37, %c0_38] : memref<1x1xf32, #tpu.memory_space<smem>>
    } else {
    }
    return
  }
  func.func @transform_0(%arg0: i32) -> (i32, i32) {
    %c0_i32 = arith.constant 0 : i32
    %c0_i32_0 = arith.constant 0 : i32
    return %arg0, %c0_i32 : i32, i32
  }
  func.func @transform_1(%arg0: i32) -> (i32, i32) {
    %c0_i32 = arith.constant 0 : i32
    %c0_i32_0 = arith.constant 0 : i32
    return %arg0, %c0_i32 : i32, i32
  }
  func.func @transform_2(%arg0: i32) -> (i32, i32) {
    %c0_i32 = arith.constant 0 : i32
    %c0_i32_0 = arith.constant 0 : i32
    %c0_i32_1 = arith.constant 0 : i32
    return %c0_i32, %c0_i32_0 : i32, i32
  }
  func.func @transform_3(%arg0: i32) -> (i32, i32) {
    %c0_i32 = arith.constant 0 : i32
    %c0_i32_0 = arith.constant 0 : i32
    return %arg0, %c0_i32 : i32, i32
  }
  func.func @transform_4(%arg0: i32) -> (i32, i32) {
    %c0_i32 = arith.constant 0 : i32
    %c0_i32_0 = arith.constant 0 : i32
    return %arg0, %c0_i32 : i32, i32
  }
  func.func @transform_5(%arg0: i32) -> (i32, i32) {
    %c0_i32 = arith.constant 0 : i32
    %c0_i32_0 = arith.constant 0 : i32
    %c0_i32_1 = arith.constant 0 : i32
    return %c0_i32, %c0_i32_0 : i32, i32
  }
}

</mosaic_0001>

<llo_original>
// kernel: tpu_custom_call.1
$region0: #{tpu_custom_call.1}
  #allocation0 [shape = 'u32[]', space=smem, size = 0x4, offset = 0x4, fixed_abs, tag = 'smem constant byte address 0x4 - core index']
  #allocation1 [shape = 'u32[144,128]{1,0:T(1,128)}', space=vmem, size = 0x12000, scoped, tag = 'internal scratch']
  #allocation2 [shape = 'f32[8,128]{1,0:T(8,128)}', space=vmem, size = 0x1000, scoped, tag = 'scratch operand']
  #allocation3 [shape = 'f32[8,32]{1,0:T(8,128)}', space=vmem, size = 0x1000, scoped, tag = 'scratch operand']
  %s0 = inlined_call_operand.hbm [shape: f32[8,128], index: 0, kind: input, shape index: {}]
  %s1 = inlined_call_operand.hbm [shape: f32[8,128], index: 1, kind: input, shape index: {}]
  %s2 = inlined_call_operand.vmem [shape: f32[1,128], index: 2, kind: input, shape index: {}]
  %s3 = inlined_call_operand.hbm [shape: f32[8,32], index: 3, kind: input, shape index: {}]
  %s4 = inlined_call_operand.hbm [shape: f32[8,32], index: 4, kind: input, shape index: {}]
  %s5 = inlined_call_operand.hbm [shape: f32[1,1], index: 5, kind: output, shape index: {}]
  %s6 = sld [smem:[#allocation0]]
  $region54: #{tpu_custom_call.1} parent=0
    _
  %s8 = ssub.s32 1, %s6
  %s9 = scalar_select 0, %s8, %s6
  $region1: #{tpu_custom_call.1} parent=0
    #allocation4 [shape = 'u8[4096]{0}', space=vmem, size = 0x1000, scoped, tag = 'input window, operand 0, single buffered']
    #allocation5 [shape = 's32[1]{0}', space=sflag, size = 0x4, scoped, tag = 'scoped memory for tpu_custom_call.1']
    #allocation6 [shape = 's32[1]{0}', space=sflag, size = 0x4, scoped, tag = 'scoped memory for tpu_custom_call.1']
    #allocation7 [shape = 'u8[4096]{0}', space=vmem, size = 0x1000, scoped, tag = 'input window, operand 1, single buffered']
    #allocation8 [shape = 's32[1]{0}', space=sflag, size = 0x4, scoped, tag = 'scoped memory for tpu_custom_call.1']
    #allocation9 [shape = 'u8[4096]{0}', space=vmem, size = 0x1000, scoped, tag = 'input window, operand 3, single buffered']
    #allocation10 [shape = 'u8[4096]{0}', space=vmem, size = 0x1000, scoped, tag = 'input window, operand 4, single buffered']
    #allocation11 [shape = 's32[1]{0}', space=sflag, size = 0x4, scoped, tag = 'scoped memory for tpu_custom_call.1']
    #allocation12 [shape = 'u8[512]{0}', space=smem, size = 0x200, scoped, tag = 'output window, operand 0, single buffered']
    %10 = vsyncpa [#allocation5], 0
    %11 = vsyncpa [#allocation8], 0
    %12 = vsyncpa [#allocation11], 0
    %13 = vsyncpa [#allocation6], 0
    // Predicated region
    $region2: #{tpu_custom_call.1} parent=1 // pred_check
      _
    $region3: #{tpu_custom_call.1} parent=1 // pred_check_branch
      %15 = sbr.rel (0) target = $region5
    $region4: #{tpu_custom_call.1} parent=1 // pred_region
      %s17 = ssub.s32 128, 128
      %18 = vsyncadd [#allocation5], %s17
      %s20 = sshll.u32 [#allocation4], 4
      %s21 = int_to_ptr.vmem [resolvable:$true] %s20
      %23 = dma.hbm_to_vmem [thread:$0]  %s0, 128, %s21, [#allocation5]
    $region5: #{tpu_custom_call.1} parent=1 // pred_fallthru
      _
    // Predicated region
    $region6: #{tpu_custom_call.1} parent=1 // pred_check
      _
    $region7: #{tpu_custom_call.1} parent=1 // pred_check_branch
      %25 = sbr.rel (0) target = $region9
    $region8: #{tpu_custom_call.1} parent=1 // pred_region
      %s27 = ssub.s32 128, 128
      %28 = vsyncadd [#allocation8], %s27
      %s30 = sshll.u32 [#allocation7], 4
      %s31 = int_to_ptr.vmem [resolvable:$true] %s30
      %33 = dma.hbm_to_vmem [thread:$0]  %s1, 128, %s31, [#allocation8]
    $region9: #{tpu_custom_call.1} parent=1 // pred_fallthru
      _
    // Predicated region
    $region10: #{tpu_custom_call.1} parent=1 // pred_check
      _
    $region11: #{tpu_custom_call.1} parent=1 // pred_check_branch
      %35 = sbr.rel (0) target = $region13
    $region12: #{tpu_custom_call.1} parent=1 // pred_region
      _
    $region13: #{tpu_custom_call.1} parent=1 // pred_fallthru
      _
    // Predicated region
    $region14: #{tpu_custom_call.1} parent=1 // pred_check
      _
    $region15: #{tpu_custom_call.1} parent=1 // pred_check_branch
      %37 = sbr.rel (0) target = $region17
    $region16: #{tpu_custom_call.1} parent=1 // pred_region
      %s39 = ssub.s32 128, 128
      %40 = vsyncadd [#allocation8], %s39
      %s42 = sshll.u32 [#allocation9], 4
      %s43 = int_to_ptr.vmem [resolvable:$true] %s42
      %45 = dma.hbm_to_vmem [thread:$0]  %s3, 128, %s43, [#allocation8]
    $region17: #{tpu_custom_call.1} parent=1 // pred_fallthru
      _
    // Predicated region
    $region18: #{tpu_custom_call.1} parent=1 // pred_check
      _
    $region19: #{tpu_custom_call.1} parent=1 // pred_check_branch
      %47 = sbr.rel (0) target = $region21
    $region20: #{tpu_custom_call.1} parent=1 // pred_region
      %s49 = ssub.s32 128, 128
      %50 = vsyncadd [#allocation11], %s49
      %s52 = sshll.u32 [#allocation10], 4
      %s53 = int_to_ptr.vmem [resolvable:$true] %s52
      %55 = dma.hbm_to_vmem [thread:$0]  %s4, 128, %s53, [#allocation11]
    $region21: #{tpu_custom_call.1} parent=1 // pred_fallthru
      _
    // Predicated region
    $region22: #{tpu_custom_call.1} parent=1 // pred_check
      _
    $region23: #{tpu_custom_call.1} parent=1 // pred_check_branch
      %57 = sbr.rel (0) target = $region25
    $region24: #{tpu_custom_call.1} parent=1 // pred_region
      %58 = dma.done [#allocation5], 128
    $region25: #{tpu_custom_call.1} parent=1 // pred_fallthru
      _
    // Predicated region
    $region26: #{tpu_custom_call.1} parent=1 // pred_check
      _
    $region27: #{tpu_custom_call.1} parent=1 // pred_check_branch
      %60 = sbr.rel (0) target = $region29
    $region28: #{tpu_custom_call.1} parent=1 // pred_region
      %61 = dma.done [#allocation8], 128
    $region29: #{tpu_custom_call.1} parent=1 // pred_fallthru
      _
    // Predicated region
    $region30: #{tpu_custom_call.1} parent=1 // pred_check
      _
    $region31: #{tpu_custom_call.1} parent=1 // pred_check_branch
      %63 = sbr.rel (0) target = $region33
    $region32: #{tpu_custom_call.1} parent=1 // pred_region
      %64 = dma.done [#allocation8], 128
    $region33: #{tpu_custom_call.1} parent=1 // pred_fallthru
      _
    // Predicated region
    $region34: #{tpu_custom_call.1} parent=1 // pred_check
      _
    $region35: #{tpu_custom_call.1} parent=1 // pred_check_branch
      %66 = sbr.rel (0) target = $region37
    $region36: #{tpu_custom_call.1} parent=1 // pred_region
      %67 = dma.done [#allocation11], 128
    $region37: #{tpu_custom_call.1} parent=1 // pred_fallthru
      _
    %p68 = scmp.eq.s32.totalorder 0, 0
    // Predicated region
    $region38: #{tpu_custom_call.1} parent=1 // pred_check
      %p69 = pneg %p68
    $region39: #{tpu_custom_call.1} parent=1 // pred_check_branch
      %71 = sbr.rel (%p69) target = $region41
    $region40: #{tpu_custom_call.1} parent=1 // pred_region
      %72 = vst [vmem:[#allocation2] sm:$0xff] 0.0
      %vm73 = vcmask 261120
      %74 = vst.msk [vmem:[#allocation3] sm:$0xff] %vm73, 0.0
    $region41: #{tpu_custom_call.1} parent=1 // pred_fallthru
      _
    %v75 = vld [vmem:[#allocation4] sm:$0xff]
    %v76 = vld [vmem:[#allocation7] sm:$0xff]
    %v77 = vld [vmem:[%s2] sm:$0x1]
    %vm78 = vcmp.ne.f32.partialorder %v77, 0.0
    %v79 = vxor.u32 %v75, 2147483648
    %v80 = vmul.f32 %v79, 1.442695
    %v81 = vpow.pop %v80
    %v82 = vadd.f32 %v81, 1.0
    %v83 = vrcp.pop %v82
    %v84 = vmul.f32 1.0, %v83
    %v85 = vsel %vm78, 1, 0
    %v86 = vlaneseq
    %v87 = vshrl.u32 %v86, 7
    %v88 = vsub.s32 0, %v87
    %v89 = vrot.slane %v85, %v88
    %vm90 = vcmp.eq.s32.totalorder %v89, 1
    %v91 = vsel %vm90, %v84, %v75
    %v92 = vsub.f32 %v91, %v76
    %v93 = vmul.f32 %v92, %v92
    %v94 = vld [vmem:[#allocation9] sm:$0xff]
    %v95 = vld [vmem:[#allocation10] sm:$0xff]
    %v96 = vmul.f32 %v95, 0.5
    %v97 = vmul.f32 %v94, %v94
    %v98 = vadd.f32 %v97, 1.0
    %v99 = vmul.f32 %v98, 0.5
    %v100 = vsub.f32 0.0, %v95
    %v101 = vmul.f32 %v100, 1.442695
    %v102 = vpow.pop %v101
    %v103 = vmul.f32 %v99, %v102
    %v104 = vadd.f32 %v96, %v103
    %v105 = vsub.f32 %v104, 0.5
    %v106 = vld [vmem:[#allocation2] sm:$0xff]
    %v107 = vadd.f32 %v93, 0.0
    %v108 = vadd.f32 %v106, %v107
    %109 = vst [vmem:[#allocation2] sm:$0xff] %v108
    %v110 = vld [vmem:[#allocation3] sm:$0xff]
    %v111 = vadd.f32 %v105, 0.0
    %v112 = vadd.f32 %v110, %v111
    %vm113 = vcmask 261120
    %114 = vst.msk [vmem:[#allocation3] sm:$0xff] %vm113, %v112
    // Predicated region
    $region42: #{tpu_custom_call.1} parent=1 // pred_check
      %p115 = pneg %p68
    $region43: #{tpu_custom_call.1} parent=1 // pred_check_branch
      %117 = sbr.rel (%p115) target = $region45
    $region44: #{tpu_custom_call.1} parent=1 // pred_region
      %v118 = vld [vmem:[#allocation2] sm:$0xff]
      %119 = vadd.xlane.f32.xlu0 %v118
      %v120 = vpop.xlane.xlu0 %119
      %v121 = vrot.slane %v120, 4
      %v122 = vadd.f32 %v120, %v121
      %v123 = vrot.slane %v122, 2
      %v124 = vadd.f32 %v122, %v123
      %v125 = vrot.slane %v124, 1
      %v126 = vadd.f32 %v124, %v125
      %s127 = vtos %v126
      %s128 = smul.f32 %s127, 0.0009765625
      %v129 = vld [vmem:[#allocation3] sm:$0xff]
      %v130 = vsel %vm113, %v129, 0.0
      %131 = vadd.xlane.f32.xlu0 %v130
      %v132 = vpop.xlane.xlu0 %131
      %v133 = vrot.slane %v132, 4
      %v134 = vadd.f32 %v132, %v133
      %v135 = vrot.slane %v134, 2
      %v136 = vadd.f32 %v134, %v135
      %v137 = vrot.slane %v136, 1
      %v138 = vadd.f32 %v136, %v137
      %s139 = vtos %v138
      %s140 = smul.f32 %s139, 0.00390625
      %s141 = sadd.f32 %s128, 0.1
      %s142 = sadd.f32 %s141, %s140
      %s143 = scalar_lea.smem [#allocation12], 0
      %144 = sst [smem:[%s143]] %s142
    $region45: #{tpu_custom_call.1} parent=1 // pred_fallthru
      _
    // Predicated region
    $region46: #{tpu_custom_call.1} parent=1 // pred_check
      _
    $region47: #{tpu_custom_call.1} parent=1 // pred_check_branch
      %146 = sbr.rel (0) target = $region49
    $region48: #{tpu_custom_call.1} parent=1 // pred_region
      %s148 = ssub.s32 16, 16
      %149 = vsyncadd [#allocation6], %s148
      %152 = dma.smem_to_hbm [#allocation12], 16, %s5, [#allocation6]
    $region49: #{tpu_custom_call.1} parent=1 // pred_fallthru
      _
    // Predicated region
    $region50: #{tpu_custom_call.1} parent=1 // pred_check
      _
    $region51: #{tpu_custom_call.1} parent=1 // pred_check_branch
      %154 = sbr.rel (0) target = $region53
    $region52: #{tpu_custom_call.1} parent=1 // pred_region
      %155 = dma.done [#allocation6], 16
    $region53: #{tpu_custom_call.1} parent=1 // pred_fallthru
      _
    %156 = sfence
    %157 = vsyncpa [#allocation5], 1
    %158 = vsyncpa [#allocation8], 1
    %159 = vsyncpa [#allocation11], 1
    %160 = vsyncpa [#allocation6], 1

</llo_original>
